<compile_context>
chip_gen: v7x
topology: tpu7x:2x2x1
jax: 0.10.0
libtpu: 0.0.40
codegen_flags: <defaults>
</compile_context>

<pallas_src>
import functools

import jax
import jax.numpy as jnp
from jax import lax
from jax.experimental import pallas as pl
from jax.experimental.pallas import tpu as pltpu


def _round_up(a, m):
    return ((a + m - 1) // m) * m


def _make_conv_bn_kernel(K, img_w, tn):
    """Build the per-(batch, N-tile) kernel body.

    Ref shapes seen by the kernel:
      x_ref     : (Cin, tn + halo_pad)  flattened-image window (lanes = flat H*W)
      w_ref     : (K*K, Cout, Cin)      BN-scale-folded conv taps
      shift_ref : (Cout, 1)             folded BN shift (incl. conv bias)
      o_ref     : (Cout, tn)            lane-dense output tile
      acc_ref   : (Cout, tn) f32        VMEM accumulator scratch
    """

    def kernel(x_ref, w_ref, shift_ref, o_ref, acc_ref):
        for idx in range(K * K):
            ki, kj = divmod(idx, K)
            off = ki * img_w + kj                       # static lane offset of this tap
            xs = x_ref[:, off:off + tn]                 # (Cin, tn) static slice
            tap = lax.dot_general(
                w_ref[idx], xs,
                dimension_numbers=(((1,), (0,)), ((), ())),
                preferred_element_type=jnp.float32)     # (Cout, tn) on the MXU
            if idx == 0:
                acc_ref[...] = tap
            else:
                acc_ref[...] += tap
        # Fused BN/bias shift (scale already folded into the weights); one
        # lane-dense store per tile.
        o_ref[...] = (acc_ref[...] + shift_ref[...]).astype(o_ref.dtype)

    return kernel


def basic_conv_forward(x, conv_w, conv_b, bn_gamma, bn_beta, bn_mean, bn_var,
                       *, stride=1, eps=1e-5, tn_max=8192,
                       compute_dtype=jnp.float32,
                       vmem_tile_budget=8 * 1024 * 1024):
    """x: (B, Cin, H, W); conv_w: (Cout, Cin, K, K).  Returns (B, Cout, Ho, Wo).

    Conv2d(kernel_size=K, stride=stride, padding=0) + eval-mode BatchNorm2d
    folded into a per-channel affine.
    """
    B, Cin, H, W = x.shape
    Cout, _, K, _ = conv_w.shape
    Ho = (H - K) // stride + 1
    Wo = (W - K) // stride + 1

    # Dense (stride-1) pre-activation positions needed, in flattened (row*W+col)
    # coordinates: all columns of rows 0 .. (Ho-1)*stride.  Stride and the
    # per-row tail are sliced off in the wrapper after the kernel.
    rows_needed = (Ho - 1) * stride + 1
    cols_needed = (Wo - 1) * stride + 1
    n_valid = rows_needed * W

    # ---- tile sizing: lane-dense, budgeted against per-generation VMEM ----
    esize = jnp.dtype(compute_dtype).itemsize
    # per-lane-column VMEM bytes: x window (double-buffered) + out tile
    # (double-buffered) + f32 accumulator + transient tap operands/results.
    per_col = 2 * Cin * esize + 3 * Cout * 4 + (Cin + Cout) * 4
    tn_cap = max(128, (vmem_tile_budget // per_col) // 128 * 128)
    tn = min(_round_up(n_valid, 128), _round_up(tn_max, 128), tn_cap)
    n_tiles = -(-n_valid // tn)
    n_pad = n_tiles * tn

    halo = (K - 1) * W + (K - 1)            # max flat offset of a conv tap
    halo_pad = _round_up(halo, 128)
    win = tn + halo_pad                     # per-tile x window width (lane-dense)

    # ---- wrapper-side layout plumbing (no im2col: ~1x input bytes) ----
    x_flat = x.reshape(B, Cin, H * W).astype(compute_dtype)
    x_len = n_pad + halo_pad
    if x_len > H * W:
        x_flat = jnp.pad(x_flat, ((0, 0), (0, 0), (0, x_len - H * W)))
    elif x_len < H * W:
        x_flat = x_flat[:, :, :x_len]       # trailing rows are never read
    if n_tiles == 1:
        x_win = x_flat.reshape(B, 1, Cin, win)            # pure reshape, no copy
    else:
        # Overlapping windows duplicate only the halo (~halo_pad/tn of the
        # input), not K*K like im2col.
        x_win = jnp.stack(
            [x_flat[:, :, t * tn:t * tn + win] for t in range(n_tiles)], axis=1)

    # Fold BN (inference / running stats) into the weights and per-channel shift.
    scale_vec = bn_gamma / jnp.sqrt(bn_var + eps)             # (Cout,)
    shift_vec = bn_beta + (conv_b - bn_mean) * scale_vec      # (Cout,)
    w_taps = conv_w * scale_vec[:, None, None, None]          # exact fold
    w_taps = jnp.transpose(w_taps, (2, 3, 0, 1)).reshape(K * K, Cout, Cin)
    w_taps = w_taps.astype(compute_dtype)
    shift = shift_vec.reshape(Cout, 1).astype(jnp.float32)

    kernel = _make_conv_bn_kernel(K, W, tn)

    out_t = pl.pallas_call(
        kernel,
        out_shape=jax.ShapeDtypeStruct((B, Cout, n_pad), x.dtype),
        grid=(B, n_tiles),
        in_specs=[
            pl.BlockSpec((None, None, Cin, win), lambda b, n: (b, n, 0, 0)),
            pl.BlockSpec((K * K, Cout, Cin), lambda b, n: (0, 0, 0)),
            pl.BlockSpec((Cout, 1), lambda b, n: (0, 0)),
        ],
        out_specs=pl.BlockSpec((None, Cout, tn), lambda b, n: (b, 0, n)),
        scratch_shapes=[pltpu.VMEM((Cout, tn), jnp.float32)],
        compiler_params=pltpu.CompilerParams(
            dimension_semantics=("parallel", "parallel"),
            # Above v5e's 16 MiB default scoped limit, at/below v6e/v7x
            # defaults, and well under v7x's 64 MiB physical VMEM.
            vmem_limit_bytes=32 * 1024 * 1024),
    )(x_win, w_taps, shift)

    # Padded / junk columns (beyond n_valid, and intra-row cols >= cols_needed)
    # are dropped here; only reshape + slicing, no transpose.
    pre = out_t[:, :, :n_valid].reshape(B, Cout, rows_needed, W)
    return pre[:, :, ::stride, :cols_needed:stride]


def basic_conv_reference(x, conv_w, conv_b, bn_gamma, bn_beta, bn_mean, bn_var,
                         *, stride=1, eps=1e-5):
    """Plain-JAX reference mirroring Conv2d(valid, stride) + eval-mode BatchNorm2d."""
    out = lax.conv_general_dilated(
        x, conv_w, window_strides=(stride, stride), padding="VALID",
        dimension_numbers=("NCHW", "OIHW", "NCHW"))
    out = out + conv_b[None, :, None, None]
    inv = bn_gamma / jnp.sqrt(bn_var + eps)
    return ((out - bn_mean[None, :, None, None]) * inv[None, :, None, None]
            + bn_beta[None, :, None, None])


if __name__ == "__main__":
    B, Cin, Cout, H, W, K, S = 2, 4, 8, 16, 16, 3, 1

    key = jax.random.PRNGKey(0)
    kx, kw, kb, km, kv = jax.random.split(key, 5)

    x = jax.random.normal(kx, (B, Cin, H, W), dtype=jnp.float32)
    conv_w = 0.1 * jax.random.normal(kw, (Cout, Cin, K, K), dtype=jnp.float32)
    conv_b = 0.1 * jax.random.normal(kb, (Cout,), dtype=jnp.float32)
    # BN affine per BasicConv.__init__ (weight=1, bias=0); nontrivial running
    # stats so the normalization path is actually exercised / verified.
    bn_gamma = jnp.ones((Cout,), dtype=jnp.float32)
    bn_beta = jnp.zeros((Cout,), dtype=jnp.float32)
    bn_mean = 0.1 * jax.random.normal(km, (Cout,), dtype=jnp.float32)
    bn_var = 1.0 + 0.1 * jax.random.uniform(kv, (Cout,), dtype=jnp.float32)

    fwd = jax.jit(functools.partial(basic_conv_forward, stride=S))
    out = fwd(x, conv_w, conv_b, bn_gamma, bn_beta, bn_mean, bn_var)
    jax.block_until_ready(out)

    out_ref = basic_conv_reference(x, conv_w, conv_b, bn_gamma, bn_beta,
                                   bn_mean, bn_var, stride=S)
    Ho = (H - K) // S + 1
    Wo = (W - K) // S + 1
    assert out.shape == (B, Cout, Ho, Wo)
    assert jnp.allclose(out, out_ref, atol=1e-4, rtol=1e-4)

    print("KERNEL_OK")
</pallas_src>

<mosaic_0001>
module attributes {stable_mosaic.version = 11 : i64} {
  func.func @kernel(%arg0: i32, %arg1: i32, %arg2: memref<1x1x4x384xf32, #tpu.memory_space<vmem>>, %arg3: memref<9x8x4xf32, #tpu.memory_space<vmem>>, %arg4: memref<8x1xf32, #tpu.memory_space<vmem>>, %arg5: memref<1x8x256xf32, #tpu.memory_space<vmem>>, %arg6: memref<8x256xf32, #tpu.memory_space<vmem>>) attributes {dimension_semantics = [#tpu.dimension_semantics<parallel>, #tpu.dimension_semantics<parallel>], iteration_bounds = array<i64: 2, 1>, scalar_prefetch = 0 : i64, scratch_operands = 1 : i64, tpu.core_type = #tpu.core_type<tc>, window_params = [{transform_indices = @transform_0, window_bounds = array<i64: 1, 1, 4, 384>}, {pipeline_mode = #tpu.pipeline_mode<synchronous>, transform_indices = @transform_1, window_bounds = array<i64: 9, 8, 4>}, {pipeline_mode = #tpu.pipeline_mode<synchronous>, transform_indices = @transform_2, window_bounds = array<i64: 8, 1>}, {transform_indices = @transform_3, window_bounds = array<i64: 1, 8, 256>}]} {
    %c0 = arith.constant 0 : index
    %c0_0 = arith.constant 0 : index
    %c0_1 = arith.constant 0 : index
    %c0_2 = arith.constant 0 : index
    %0 = vector.load %arg2[%c0, %c0_0, %c0_1, %c0_2] : memref<1x1x4x384xf32, #tpu.memory_space<vmem>>, vector<1x1x4x256xf32>
    %1 = vector.shape_cast %0 : vector<1x1x4x256xf32> to vector<4x256xf32>
    %c0_3 = arith.constant 0 : index
    %c0_4 = arith.constant 0 : index
    %c0_5 = arith.constant 0 : index
    %2 = vector.load %arg3[%c0_3, %c0_4, %c0_5] : memref<9x8x4xf32, #tpu.memory_space<vmem>>, vector<1x8x4xf32>
    %3 = vector.shape_cast %2 : vector<1x8x4xf32> to vector<8x4xf32>
    %cst = arith.constant dense<0.000000e+00> : vector<8x256xf32>
    %4 = tpu.matmul %3, %1, %cst {dimension_numbers = #tpu.dot_dimension_numbers<[1], [0], [0], [1], [0, 0, 1, 1], [], []>} : vector<8x4xf32>, vector<4x256xf32>, vector<8x256xf32> -> vector<8x256xf32>
    %c0_6 = arith.constant 0 : index
    %c0_7 = arith.constant 0 : index
    %5 = vector.load %arg6[%c0_6, %c0_7] : memref<8x256xf32, #tpu.memory_space<vmem>>, vector<8x256xf32>
    tpu.vector_store %arg6[%c0_6, %c0_7], %4 {strides = array<i32>} : memref<8x256xf32, #tpu.memory_space<vmem>>, vector<8x256xf32>,
    %c0_8 = arith.constant 0 : index
    %c0_9 = arith.constant 0 : index
    %c0_10 = arith.constant 0 : index
    %c1 = arith.constant 1 : index
    %6 = vector.load %arg2[%c0_8, %c0_9, %c0_10, %c1] : memref<1x1x4x384xf32, #tpu.memory_space<vmem>>, vector<1x1x4x256xf32>
    %7 = vector.shape_cast %6 : vector<1x1x4x256xf32> to vector<4x256xf32>
    %c1_11 = arith.constant 1 : index
    %c0_12 = arith.constant 0 : index
    %c0_13 = arith.constant 0 : index
    %8 = vector.load %arg3[%c1_11, %c0_12, %c0_13] : memref<9x8x4xf32, #tpu.memory_space<vmem>>, vector<1x8x4xf32>
    %9 = vector.shape_cast %8 : vector<1x8x4xf32> to vector<8x4xf32>
    %cst_14 = arith.constant dense<0.000000e+00> : vector<8x256xf32>
    %10 = tpu.matmul %9, %7, %cst_14 {dimension_numbers = #tpu.dot_dimension_numbers<[1], [0], [0], [1], [0, 0, 1, 1], [], []>} : vector<8x4xf32>, vector<4x256xf32>, vector<8x256xf32> -> vector<8x256xf32>
    %c0_15 = arith.constant 0 : index
    %c0_16 = arith.constant 0 : index
    %11 = vector.load %arg6[%c0_15, %c0_16] : memref<8x256xf32, #tpu.memory_space<vmem>>, vector<8x256xf32>
    %12 = arith.addf %11, %10 : vector<8x256xf32>
    %c0_17 = arith.constant 0 : index
    %c0_18 = arith.constant 0 : index
    %13 = vector.load %arg6[%c0_17, %c0_18] : memref<8x256xf32, #tpu.memory_space<vmem>>, vector<8x256xf32>
    tpu.vector_store %arg6[%c0_17, %c0_18], %12 {strides = array<i32>} : memref<8x256xf32, #tpu.memory_space<vmem>>, vector<8x256xf32>,
    %c0_19 = arith.constant 0 : index
    %c0_20 = arith.constant 0 : index
    %c0_21 = arith.constant 0 : index
    %c2 = arith.constant 2 : index
    %14 = vector.load %arg2[%c0_19, %c0_20, %c0_21, %c2] : memref<1x1x4x384xf32, #tpu.memory_space<vmem>>, vector<1x1x4x256xf32>
    %15 = vector.shape_cast %14 : vector<1x1x4x256xf32> to vector<4x256xf32>
    %c2_22 = arith.constant 2 : index
    %c0_23 = arith.constant 0 : index
    %c0_24 = arith.constant 0 : index
    %16 = vector.load %arg3[%c2_22, %c0_23, %c0_24] : memref<9x8x4xf32, #tpu.memory_space<vmem>>, vector<1x8x4xf32>
    %17 = vector.shape_cast %16 : vector<1x8x4xf32> to vector<8x4xf32>
    %cst_25 = arith.constant dense<0.000000e+00> : vector<8x256xf32>
    %18 = tpu.matmul %17, %15, %cst_25 {dimension_numbers = #tpu.dot_dimension_numbers<[1], [0], [0], [1], [0, 0, 1, 1], [], []>} : vector<8x4xf32>, vector<4x256xf32>, vector<8x256xf32> -> vector<8x256xf32>
    %c0_26 = arith.constant 0 : index
    %c0_27 = arith.constant 0 : index
    %19 = vector.load %arg6[%c0_26, %c0_27] : memref<8x256xf32, #tpu.memory_space<vmem>>, vector<8x256xf32>
    %20 = arith.addf %19, %18 : vector<8x256xf32>
    %c0_28 = arith.constant 0 : index
    %c0_29 = arith.constant 0 : index
    %21 = vector.load %arg6[%c0_28, %c0_29] : memref<8x256xf32, #tpu.memory_space<vmem>>, vector<8x256xf32>
    tpu.vector_store %arg6[%c0_28, %c0_29], %20 {strides = array<i32>} : memref<8x256xf32, #tpu.memory_space<vmem>>, vector<8x256xf32>,
    %c0_30 = arith.constant 0 : index
    %c0_31 = arith.constant 0 : index
    %c0_32 = arith.constant 0 : index
    %c16 = arith.constant 16 : index
    %22 = vector.load %arg2[%c0_30, %c0_31, %c0_32, %c16] : memref<1x1x4x384xf32, #tpu.memory_space<vmem>>, vector<1x1x4x256xf32>
    %23 = vector.shape_cast %22 : vector<1x1x4x256xf32> to vector<4x256xf32>
    %c3 = arith.constant 3 : index
    %c0_33 = arith.constant 0 : index
    %c0_34 = arith.constant 0 : index
    %24 = vector.load %arg3[%c3, %c0_33, %c0_34] : memref<9x8x4xf32, #tpu.memory_space<vmem>>, vector<1x8x4xf32>
    %25 = vector.shape_cast %24 : vector<1x8x4xf32> to vector<8x4xf32>
    %cst_35 = arith.constant dense<0.000000e+00> : vector<8x256xf32>
    %26 = tpu.matmul %25, %23, %cst_35 {dimension_numbers = #tpu.dot_dimension_numbers<[1], [0], [0], [1], [0, 0, 1, 1], [], []>} : vector<8x4xf32>, vector<4x256xf32>, vector<8x256xf32> -> vector<8x256xf32>
    %c0_36 = arith.constant 0 : index
    %c0_37 = arith.constant 0 : index
    %27 = vector.load %arg6[%c0_36, %c0_37] : memref<8x256xf32, #tpu.memory_space<vmem>>, vector<8x256xf32>
    %28 = arith.addf %27, %26 : vector<8x256xf32>
    %c0_38 = arith.constant 0 : index
    %c0_39 = arith.constant 0 : index
    %29 = vector.load %arg6[%c0_38, %c0_39] : memref<8x256xf32, #tpu.memory_space<vmem>>, vector<8x256xf32>
    tpu.vector_store %arg6[%c0_38, %c0_39], %28 {strides = array<i32>} : memref<8x256xf32, #tpu.memory_space<vmem>>, vector<8x256xf32>,
    %c0_40 = arith.constant 0 : index
    %c0_41 = arith.constant 0 : index
    %c0_42 = arith.constant 0 : index
    %c17 = arith.constant 17 : index
    %30 = vector.load %arg2[%c0_40, %c0_41, %c0_42, %c17] : memref<1x1x4x384xf32, #tpu.memory_space<vmem>>, vector<1x1x4x256xf32>
    %31 = vector.shape_cast %30 : vector<1x1x4x256xf32> to vector<4x256xf32>
    %c4 = arith.constant 4 : index
    %c0_43 = arith.constant 0 : index
    %c0_44 = arith.constant 0 : index
    %32 = vector.load %arg3[%c4, %c0_43, %c0_44] : memref<9x8x4xf32, #tpu.memory_space<vmem>>, vector<1x8x4xf32>
    %33 = vector.shape_cast %32 : vector<1x8x4xf32> to vector<8x4xf32>
    %cst_45 = arith.constant dense<0.000000e+00> : vector<8x256xf32>
    %34 = tpu.matmul %33, %31, %cst_45 {dimension_numbers = #tpu.dot_dimension_numbers<[1], [0], [0], [1], [0, 0, 1, 1], [], []>} : vector<8x4xf32>, vector<4x256xf32>, vector<8x256xf32> -> vector<8x256xf32>
    %c0_46 = arith.constant 0 : index
    %c0_47 = arith.constant 0 : index
    %35 = vector.load %arg6[%c0_46, %c0_47] : memref<8x256xf32, #tpu.memory_space<vmem>>, vector<8x256xf32>
    %36 = arith.addf %35, %34 : vector<8x256xf32>
    %c0_48 = arith.constant 0 : index
    %c0_49 = arith.constant 0 : index
    %37 = vector.load %arg6[%c0_48, %c0_49] : memref<8x256xf32, #tpu.memory_space<vmem>>, vector<8x256xf32>
    tpu.vector_store %arg6[%c0_48, %c0_49], %36 {strides = array<i32>} : memref<8x256xf32, #tpu.memory_space<vmem>>, vector<8x256xf32>,
    %c0_50 = arith.constant 0 : index
    %c0_51 = arith.constant 0 : index
    %c0_52 = arith.constant 0 : index
    %c18 = arith.constant 18 : index
    %38 = vector.load %arg2[%c0_50, %c0_51, %c0_52, %c18] : memref<1x1x4x384xf32, #tpu.memory_space<vmem>>, vector<1x1x4x256xf32>
    %39 = vector.shape_cast %38 : vector<1x1x4x256xf32> to vector<4x256xf32>
    %c5 = arith.constant 5 : index
    %c0_53 = arith.constant 0 : index
    %c0_54 = arith.constant 0 : index
    %40 = vector.load %arg3[%c5, %c0_53, %c0_54] : memref<9x8x4xf32, #tpu.memory_space<vmem>>, vector<1x8x4xf32>
    %41 = vector.shape_cast %40 : vector<1x8x4xf32> to vector<8x4xf32>
    %cst_55 = arith.constant dense<0.000000e+00> : vector<8x256xf32>
    %42 = tpu.matmul %41, %39, %cst_55 {dimension_numbers = #tpu.dot_dimension_numbers<[1], [0], [0], [1], [0, 0, 1, 1], [], []>} : vector<8x4xf32>, vector<4x256xf32>, vector<8x256xf32> -> vector<8x256xf32>
    %c0_56 = arith.constant 0 : index
    %c0_57 = arith.constant 0 : index
    %43 = vector.load %arg6[%c0_56, %c0_57] : memref<8x256xf32, #tpu.memory_space<vmem>>, vector<8x256xf32>
    %44 = arith.addf %43, %42 : vector<8x256xf32>
    %c0_58 = arith.constant 0 : index
    %c0_59 = arith.constant 0 : index
    %45 = vector.load %arg6[%c0_58, %c0_59] : memref<8x256xf32, #tpu.memory_space<vmem>>, vector<8x256xf32>
    tpu.vector_store %arg6[%c0_58, %c0_59], %44 {strides = array<i32>} : memref<8x256xf32, #tpu.memory_space<vmem>>, vector<8x256xf32>,
    %c0_60 = arith.constant 0 : index
    %c0_61 = arith.constant 0 : index
    %c0_62 = arith.constant 0 : index
    %c32 = arith.constant 32 : index
    %46 = vector.load %arg2[%c0_60, %c0_61, %c0_62, %c32] : memref<1x1x4x384xf32, #tpu.memory_space<vmem>>, vector<1x1x4x256xf32>
    %47 = vector.shape_cast %46 : vector<1x1x4x256xf32> to vector<4x256xf32>
    %c6 = arith.constant 6 : index
    %c0_63 = arith.constant 0 : index
    %c0_64 = arith.constant 0 : index
    %48 = vector.load %arg3[%c6, %c0_63, %c0_64] : memref<9x8x4xf32, #tpu.memory_space<vmem>>, vector<1x8x4xf32>
    %49 = vector.shape_cast %48 : vector<1x8x4xf32> to vector<8x4xf32>
    %cst_65 = arith.constant dense<0.000000e+00> : vector<8x256xf32>
    %50 = tpu.matmul %49, %47, %cst_65 {dimension_numbers = #tpu.dot_dimension_numbers<[1], [0], [0], [1], [0, 0, 1, 1], [], []>} : vector<8x4xf32>, vector<4x256xf32>, vector<8x256xf32> -> vector<8x256xf32>
    %c0_66 = arith.constant 0 : index
    %c0_67 = arith.constant 0 : index
    %51 = vector.load %arg6[%c0_66, %c0_67] : memref<8x256xf32, #tpu.memory_space<vmem>>, vector<8x256xf32>
    %52 = arith.addf %51, %50 : vector<8x256xf32>
    %c0_68 = arith.constant 0 : index
    %c0_69 = arith.constant 0 : index
    %53 = vector.load %arg6[%c0_68, %c0_69] : memref<8x256xf32, #tpu.memory_space<vmem>>, vector<8x256xf32>
    tpu.vector_store %arg6[%c0_68, %c0_69], %52 {strides = array<i32>} : memref<8x256xf32, #tpu.memory_space<vmem>>, vector<8x256xf32>,
    %c0_70 = arith.constant 0 : index
    %c0_71 = arith.constant 0 : index
    %c0_72 = arith.constant 0 : index
    %c33 = arith.constant 33 : index
    %54 = vector.load %arg2[%c0_70, %c0_71, %c0_72, %c33] : memref<1x1x4x384xf32, #tpu.memory_space<vmem>>, vector<1x1x4x256xf32>
    %55 = vector.shape_cast %54 : vector<1x1x4x256xf32> to vector<4x256xf32>
    %c7 = arith.constant 7 : index
    %c0_73 = arith.constant 0 : index
    %c0_74 = arith.constant 0 : index
    %56 = vector.load %arg3[%c7, %c0_73, %c0_74] : memref<9x8x4xf32, #tpu.memory_space<vmem>>, vector<1x8x4xf32>
    %57 = vector.shape_cast %56 : vector<1x8x4xf32> to vector<8x4xf32>
    %cst_75 = arith.constant dense<0.000000e+00> : vector<8x256xf32>
    %58 = tpu.matmul %57, %55, %cst_75 {dimension_numbers = #tpu.dot_dimension_numbers<[1], [0], [0], [1], [0, 0, 1, 1], [], []>} : vector<8x4xf32>, vector<4x256xf32>, vector<8x256xf32> -> vector<8x256xf32>
    %c0_76 = arith.constant 0 : index
    %c0_77 = arith.constant 0 : index
    %59 = vector.load %arg6[%c0_76, %c0_77] : memref<8x256xf32, #tpu.memory_space<vmem>>, vector<8x256xf32>
    %60 = arith.addf %59, %58 : vector<8x256xf32>
    %c0_78 = arith.constant 0 : index
    %c0_79 = arith.constant 0 : index
    %61 = vector.load %arg6[%c0_78, %c0_79] : memref<8x256xf32, #tpu.memory_space<vmem>>, vector<8x256xf32>
    tpu.vector_store %arg6[%c0_78, %c0_79], %60 {strides = array<i32>} : memref<8x256xf32, #tpu.memory_space<vmem>>, vector<8x256xf32>,
    %c0_80 = arith.constant 0 : index
    %c0_81 = arith.constant 0 : index
    %c0_82 = arith.constant 0 : index
    %c34 = arith.constant 34 : index
    %62 = vector.load %arg2[%c0_80, %c0_81, %c0_82, %c34] : memref<1x1x4x384xf32, #tpu.memory_space<vmem>>, vector<1x1x4x256xf32>
    %63 = vector.shape_cast %62 : vector<1x1x4x256xf32> to vector<4x256xf32>
    %c8 = arith.constant 8 : index
    %c0_83 = arith.constant 0 : index
    %c0_84 = arith.constant 0 : index
    %64 = vector.load %arg3[%c8, %c0_83, %c0_84] : memref<9x8x4xf32, #tpu.memory_space<vmem>>, vector<1x8x4xf32>
    %65 = vector.shape_cast %64 : vector<1x8x4xf32> to vector<8x4xf32>
    %cst_85 = arith.constant dense<0.000000e+00> : vector<8x256xf32>
    %66 = tpu.matmul %65, %63, %cst_85 {dimension_numbers = #tpu.dot_dimension_numbers<[1], [0], [0], [1], [0, 0, 1, 1], [], []>} : vector<8x4xf32>, vector<4x256xf32>, vector<8x256xf32> -> vector<8x256xf32>
    %c0_86 = arith.constant 0 : index
    %c0_87 = arith.constant 0 : index
    %67 = vector.load %arg6[%c0_86, %c0_87] : memref<8x256xf32, #tpu.memory_space<vmem>>, vector<8x256xf32>
    %68 = arith.addf %67, %66 : vector<8x256xf32>
    %c0_88 = arith.constant 0 : index
    %c0_89 = arith.constant 0 : index
    %69 = vector.load %arg6[%c0_88, %c0_89] : memref<8x256xf32, #tpu.memory_space<vmem>>, vector<8x256xf32>
    tpu.vector_store %arg6[%c0_88, %c0_89], %68 {strides = array<i32>} : memref<8x256xf32, #tpu.memory_space<vmem>>, vector<8x256xf32>,
    %c0_90 = arith.constant 0 : index
    %c0_91 = arith.constant 0 : index
    %70 = vector.load %arg6[%c0_90, %c0_91] : memref<8x256xf32, #tpu.memory_space<vmem>>, vector<8x256xf32>
    %c0_92 = arith.constant 0 : index
    %c0_93 = arith.constant 0 : index
    %71 = vector.load %arg4[%c0_92, %c0_93] : memref<8x1xf32, #tpu.memory_space<vmem>>, vector<8x1xf32>
    %72 = vector.broadcast %71 : vector<8x1xf32> to vector<8x256xf32>
    %73 = arith.addf %70, %72 : vector<8x256xf32>
    %c0_94 = arith.constant 0 : index
    %c0_95 = arith.constant 0 : index
    %c0_96 = arith.constant 0 : index
    %74 = vector.load %arg5[%c0_94, %c0_95, %c0_96] : memref<1x8x256xf32, #tpu.memory_space<vmem>>, vector<1x8x256xf32>
    %75 = vector.shape_cast %74 : vector<1x8x256xf32> to vector<8x256xf32>
    %76 = vector.shape_cast %73 : vector<8x256xf32> to vector<1x8x256xf32>
    tpu.vector_store %arg5[%c0_94, %c0_95, %c0_96], %76 {strides = array<i32>} : memref<1x8x256xf32, #tpu.memory_space<vmem>>, vector<1x8x256xf32>,
    return
  }
  func.func @transform_0(%arg0: i32, %arg1: i32) -> (i32, i32, i32, i32) {
    %c0_i32 = arith.constant 0 : i32
    %c0_i32_0 = arith.constant 0 : i32
    %c0_i32_1 = arith.constant 0 : i32
    return %arg0, %arg1, %c0_i32, %c0_i32_0 : i32, i32, i32, i32
  }
  func.func @transform_1(%arg0: i32, %arg1: i32) -> (i32, i32, i32) {
    %c0_i32 = arith.constant 0 : i32
    %c0_i32_0 = arith.constant 0 : i32
    %c0_i32_1 = arith.constant 0 : i32
    %c0_i32_2 = arith.constant 0 : i32
    return %c0_i32, %c0_i32_0, %c0_i32_1 : i32, i32, i32
  }
  func.func @transform_2(%arg0: i32, %arg1: i32) -> (i32, i32) {
    %c0_i32 = arith.constant 0 : i32
    %c0_i32_0 = arith.constant 0 : i32
    %c0_i32_1 = arith.constant 0 : i32
    return %c0_i32, %c0_i32_0 : i32, i32
  }
  func.func @transform_3(%arg0: i32, %arg1: i32) -> (i32, i32, i32) {
    %c0_i32 = arith.constant 0 : i32
    %c0_i32_0 = arith.constant 0 : i32
    return %arg0, %c0_i32, %arg1 : i32, i32, i32
  }
}

</mosaic_0001>

<llo_original>
// kernel: basic_conv_forward.1
$region0: #{basic_conv_forward.1}
  #allocation0 [shape = 'u32[]', space=smem, size = 0x4, offset = 0x4, fixed_abs, tag = 'smem constant byte address 0x4 - core index']
  #allocation1 [shape = 'u32[144,128]{1,0:T(1,128)}', space=vmem, size = 0x12000, scoped, tag = 'internal scratch']
  #allocation2 [shape = 'f32[8,256]{1,0:T(8,128)}', space=vmem, size = 0x2000, scoped, tag = 'scratch operand']
  %s0 = inlined_call_operand.vmem [shape: f32[2,1,4,384], index: 0, kind: input, shape index: {}]
  %s1 = inlined_call_operand.vmem [shape: f32[9,8,4], index: 1, kind: input, shape index: {}]
  %s2 = inlined_call_operand.vmem [shape: f32[8,1], index: 2, kind: input, shape index: {}]
  %s3 = inlined_call_operand.vmem [shape: f32[2,8,256], index: 3, kind: output, shape index: {}]
  %s4 = sld [smem:[#allocation0]]
  $region45: #{basic_conv_forward.1} parent=0
    _
  %s6 = ssub.s32 1, %s4
  %s7 = scalar_select 0, %s6, %s4
  loop: start=0, step=1, limit=4
  $region2: #{basic_conv_forward.1} parent=0 // loop_pre_header
    _
  $region3: #{basic_conv_forward.1} parent=0 // loop_header
    %s9 = sphi 0, %s13
    %p10 = scmp.ge.s32.totalorder %s9, 4
    %s16 = sphi 0, %s28
    %s17 = sphi 0, %s24
    %s18 = sphi 0, %s16
    %s19 = sphi 0, %s17
    %s20 = sphi 0, %s18
    %s21 = sphi 0, %s19
    %s33 = sphi 0, %s35
    %s36 = sphi 0, %s33
    %s37 = sphi 0, %s36
    %s53 = sphi 0, %s37
    %s57 = sphi 0, %s57
    %s59 = sphi 0, %s57
    %s60 = sphi 0, %s59
    %s74 = sphi 0, %s60
    %s78 = sphi 0, %s78
    %s80 = sphi 0, %s78
    %s81 = sphi 0, %s80
    %s95 = sphi 0, %s81
    %s103 = sphi 0, %s105
    %s106 = sphi 0, %s103
    %s107 = sphi 0, %s106
    %s123 = sphi 0, %s107
  $region4: #{basic_conv_forward.1} parent=0 // loop_header_branch
    %12 = sbr.rel (%p10) target = $region8
  $region5: #{basic_conv_forward.1} parent=0 // loop_body
    %s14 = ssub.s32 %s9, 1
    %s15 = ssub.s32 %s9, 2
    %s22 = sadd.s32 1, %s17
    %p23 = scmp.ge.s32.totalorder %s22, 1
    %s24 = scalar_select %p23, 0, %s22
    %s25 = sadd.s32 1, %s16
    %s26 = scalar_select %p23, %s25, %s16
    %p27 = scmp.ge.s32.totalorder %s26, 2
    %s28 = scalar_select %p27, 0, %s26
    %s29 = ssub.s32 %s16, %s28
    %s30 = ssub.s32 %s17, %s24
    %s31 = sor.u32 %s29, %s30
    %p32 = scmp.eq.s32.totalorder %s31, 0
    %s34 = sadd.s32 %s33, 1
    %s35 = scalar_select %p32, %s33, %s34
    %p38 = pneg %p32
    %p39 = scmp.eq.s32.totalorder %s9, 1
    %p40 = por %p38, %p39
    %p41 = scmp.ne.s32.totalorder %s33, %s36
    %p42 = scmp.eq.s32.totalorder %s9, 0
    %p43 = por %p41, %p42
    %p44 = scmp.ne.s32.totalorder %s33, %s36
    %p45 = scmp.eq.s32.totalorder %s14, 1
    %p46 = por %p44, %p45
    %p47 = scmp.ne.s32.totalorder %s36, %s37
    %p48 = scmp.eq.s32.totalorder %s14, 0
    %p49 = por %p47, %p48
    %p50 = scmp.ne.s32.totalorder %s36, %s37
    %p51 = scmp.eq.s32.totalorder %s15, 1
    %p52 = por %p50, %p51
    %p54 = scmp.ne.s32.totalorder %s37, %s53
    %p55 = scmp.eq.s32.totalorder %s15, 0
    %p56 = por %p54, %p55
    %s58 = sadd.s32 %s57, 1
    %p61 = scmp.eq.s32.totalorder %s9, 1
    %p62 = scmp.ne.s32.totalorder %s57, %s59
    %p63 = scmp.eq.s32.totalorder %s9, 0
    %p64 = por %p62, %p63
    %p65 = scmp.ne.s32.totalorder %s57, %s59
    %p66 = scmp.eq.s32.totalorder %s14, 1
    %p67 = por %p65, %p66
    %p68 = scmp.ne.s32.totalorder %s59, %s60
    %p69 = scmp.eq.s32.totalorder %s14, 0
    %p70 = por %p68, %p69
    %p71 = scmp.ne.s32.totalorder %s59, %s60
    %p72 = scmp.eq.s32.totalorder %s15, 1
    %p73 = por %p71, %p72
    %p75 = scmp.ne.s32.totalorder %s60, %s74
    %p76 = scmp.eq.s32.totalorder %s15, 0
    %p77 = por %p75, %p76
    %s79 = sadd.s32 %s78, 1
    %p82 = scmp.eq.s32.totalorder %s9, 1
    %p83 = scmp.ne.s32.totalorder %s78, %s80
    %p84 = scmp.eq.s32.totalorder %s9, 0
    %p85 = por %p83, %p84
    %p86 = scmp.ne.s32.totalorder %s78, %s80
    %p87 = scmp.eq.s32.totalorder %s14, 1
    %p88 = por %p86, %p87
    %p89 = scmp.ne.s32.totalorder %s80, %s81
    %p90 = scmp.eq.s32.totalorder %s14, 0
    %p91 = por %p89, %p90
    %p92 = scmp.ne.s32.totalorder %s80, %s81
    %p93 = scmp.eq.s32.totalorder %s15, 1
    %p94 = por %p92, %p93
    %p96 = scmp.ne.s32.totalorder %s81, %s95
    %p97 = scmp.eq.s32.totalorder %s15, 0
    %p98 = por %p96, %p97
    %s99 = ssub.s32 %s16, %s28
    %s100 = ssub.s32 %s17, %s24
    %s101 = sor.u32 %s99, %s100
    %p102 = scmp.eq.s32.totalorder %s101, 0
    %s104 = sadd.s32 %s103, 1
    %s105 = scalar_select %p102, %s103, %s104
    %p108 = pneg %p102
    %p109 = scmp.eq.s32.totalorder %s9, 1
    %p110 = por %p108, %p109
    %p111 = scmp.ne.s32.totalorder %s103, %s106
    %p112 = scmp.eq.s32.totalorder %s9, 0
    %p113 = por %p111, %p112
    %p114 = scmp.ne.s32.totalorder %s103, %s106
    %p115 = scmp.eq.s32.totalorder %s14, 1
    %p116 = por %p114, %p115
    %p117 = scmp.ne.s32.totalorder %s106, %s107
    %p118 = scmp.eq.s32.totalorder %s14, 0
    %p119 = por %p117, %p118
    %p120 = scmp.ne.s32.totalorder %s106, %s107
    %p121 = scmp.eq.s32.totalorder %s15, 1
    %p122 = por %p120, %p121
    %p124 = scmp.ne.s32.totalorder %s107, %s123
    %p125 = scmp.eq.s32.totalorder %s15, 0
    %p126 = por %p124, %p125
    %p127 = scmp.le.s32.totalorder 1, %s9
    %p128 = scmp.lt.s32.totalorder %s9, 3
    %p129 = pnand %p127, %p128
    %p130 = pneg %p129
    // Predicated region
    $region9: #{basic_conv_forward.1} parent=5 // pred_check
      _
    $region10: #{basic_conv_forward.1} parent=5 // pred_check_branch
      %132 = sbr.rel (%p129) target = $region12
    $region11: #{basic_conv_forward.1} parent=5 // pred_region
      %s133 = ssub.s32 %s9, 1
      // Predicated region
      $region13: #{basic_conv_forward.1} parent=11 // pred_check
        %p134 = pneg %p70
      $region14: #{basic_conv_forward.1} parent=11 // pred_check_branch
        %136 = sbr.rel (%p134) target = $region16
      $region15: #{basic_conv_forward.1} parent=11 // pred_region
        _
      $region16: #{basic_conv_forward.1} parent=11 // pred_fallthru
        _
      // Predicated region
      $region17: #{basic_conv_forward.1} parent=11 // pred_check
        %p137 = pneg %p91
      $region18: #{basic_conv_forward.1} parent=11 // pred_check_branch
        %139 = sbr.rel (%p137) target = $region20
      $region19: #{basic_conv_forward.1} parent=11 // pred_region
        _
      $region20: #{basic_conv_forward.1} parent=11 // pred_fallthru
        _
    $region12: #{basic_conv_forward.1} parent=5 // pred_fallthru
      _
    %p140 = scmp.lt.s32.totalorder %s9, 2
    // Predicated region
    $region21: #{basic_conv_forward.1} parent=5 // pred_check
      %p141 = pneg %p140
    $region22: #{basic_conv_forward.1} parent=5 // pred_check_branch
      %143 = sbr.rel (%p141) target = $region24
    $region23: #{basic_conv_forward.1} parent=5 // pred_region
      // Predicated region
      $region25: #{basic_conv_forward.1} parent=23 // pred_check
        %p144 = pneg %p43
      $region26: #{basic_conv_forward.1} parent=23 // pred_check_branch
        %146 = sbr.rel (%p144) target = $region28
      $region27: #{basic_conv_forward.1} parent=23 // pred_region
        %p147 = scmp.lt.s32.totalorder %s16, 1
        %s148 = scalar_select %p147, %s16, 1
        %p149 = scmp.lt.s32.totalorder %s17, 0
        %s150 = scalar_select %p149, %s17, 0
        %s151 = smul.addr %s150, 3
        %s152 = smul.addr %s148, 3
        %s153 = sadd.s32 %s151, %s152
        %s154 = smul.addr %s153, 4
        %s155 = scalar_lea.vmem %s0, %s154
      $region28: #{basic_conv_forward.1} parent=23 // pred_fallthru
        _
    $region24: #{basic_conv_forward.1} parent=5 // pred_fallthru
      _
    %p156 = scmp.le.s32.totalorder 1, %s9
    %p157 = scmp.lt.s32.totalorder %s9, 3
    %p158 = pnand %p156, %p157
    %p159 = pneg %p158
    // Predicated region
    $region29: #{basic_conv_forward.1} parent=5 // pred_check
      _
    $region30: #{basic_conv_forward.1} parent=5 // pred_check_branch
      %161 = sbr.rel (%p158) target = $region32
    $region31: #{basic_conv_forward.1} parent=5 // pred_region
      %s162 = ssub.s32 %s9, 1
      %p163 = scmp.lt.s32.totalorder %s18, 1
      %s164 = scalar_select %p163, %s18, 1
      %p165 = scmp.lt.s32.totalorder %s19, 0
      %s166 = scalar_select %p165, %s19, 0
      %s167 = smul.addr %s166, 3
      %s168 = smul.addr %s164, 3
      %s169 = sadd.s32 %s167, %s168
      %s170 = smul.addr %s169, 4
      %s171 = scalar_lea.vmem %s0, %s170
      %p172 = pneg %p49
      %p173 = pneg %p46
      %p174 = pneg %p70
      %p175 = pneg %p67
      %p176 = pneg %p91
      %p177 = pneg %p88
      %p178 = pneg %p119
      %p179 = pneg %p116
      %s180 = smul.u32 2, %s19
      %p181 = scmp.lt.s32.totalorder %s18, 1
      %s182 = scalar_select %p181, %s18, 1
      %p183 = scmp.lt.s32.totalorder %s180, 1
      %s184 = scalar_select %p183, %s180, 1
      %s185 = smul.addr %s182, 2
      %s186 = sadd.s32 %s184, %s185
      %s187 = smul.addr %s186, 8
      %s188 = scalar_lea.vmem %s3, %s187
      %p189 = scmp.lt.s32.totalorder %s18, 1
      %s190 = scalar_select %p189, %s18, 1
      %p191 = scmp.lt.s32.totalorder %s19, 0
      %s192 = scalar_select %p191, %s19, 0
      %s193 = smul.addr %s192, 3
      %s194 = smul.addr %s190, 3
      %s195 = sadd.s32 %s193, %s194
      %s196 = smul.addr %s195, 4
      %s197 = scalar_lea.vmem %s0, %s196
      %s198 = smul.u32 2, %s19
      %p199 = scmp.lt.s32.totalorder %s18, 1
      %s200 = scalar_select %p199, %s18, 1
      %p201 = scmp.lt.s32.totalorder %s198, 1
      %s202 = scalar_select %p201, %s198, 1
      %s203 = smul.addr %s200, 2
      %s204 = sadd.s32 %s202, %s203
      %s205 = smul.addr %s204, 8
      %s206 = scalar_lea.vmem %s3, %s205
      %s207 = smul.u32 2, %s19
      %v208 = vld [vmem:[%s197] sm:$0xff]
      %v209 = vld [vmem:[%s1] sm:$0xff]
      %v211 = vcombine.high %v208, %v208
      %vm212 = vcmask 31744
      %v214 = vsel %vm212, %v209, 0
      %vm216 = vcmask 1043456
      %v217 = vsel %vm216, %v208, 0
      %v219 = vsel %vm216, %v211, 0
      %221 = vmatprep.subr.mxu0 %v219
      %222 = vmatpush1.msra.mxu0 %v217
      %223 = vmatprep.subr.mxu0 0.0
      %224 = vmatpush1.msra.mxu0 0.0
      %225 = vmatprep.subr.mxu0 0.0
      %226 = vmatpush1.msra.mxu0 0.0
      %227 = vmatprep.subr.mxu0 0.0
      %228 = vmatpush1.msra.mxu0 0.0
      %229 = vmatprep.subr.mxu0 0.0
      %230 = vmatpush1.msra.mxu0 0.0
      %231 = vmatprep.subr.mxu0 0.0
      %232 = vmatpush1.msra.mxu0 0.0
      %233 = vmatprep.subr.mxu0 0.0
      %234 = vmatpush1.msra.mxu0 0.0
      %235 = vmatprep.subr.mxu0 0.0
      %236 = vmatpush1.msra.mxu0 0.0
      %237 = vmatprep.subr.mxu0 0.0
      %238 = vmatpush1.msra.mxu0 0.0
      %239 = vmatprep.subr.mxu0 0.0
      %240 = vmatpush1.msra.mxu0 0.0
      %241 = vmatprep.subr.mxu0 0.0
      %242 = vmatpush1.msra.mxu0 0.0
      %243 = vmatprep.subr.mxu0 0.0
      %244 = vmatpush1.msra.mxu0 0.0
      %245 = vmatprep.subr.mxu0 0.0
      %246 = vmatpush1.msra.mxu0 0.0
      %247 = vmatprep.subr.mxu0 0.0
      %248 = vmatpush1.msra.mxu0 0.0
      %249 = vmatprep.subr.mxu0 0.0
      %250 = vmatpush1.msra.mxu0 0.0
      %251 = vmatprep.subr.mxu0 0.0
      %252 = vmatpush1.msra.mxu0 0.0
      %253 = vmatprep.subr.mxu0 0.0
      %254 = vmatpush1.msra.mxu0 0.0
      %255 = vmatprep.subr.mxu0 0.0
      %256 = vmatpush1.msra.mxu0 0.0
      %257 = vmatprep.subr.mxu0 0.0
      %258 = vmatpush1.msra.mxu0 0.0
      %259 = vmatprep.subr.mxu0 0.0
      %260 = vmatpush1.msra.mxu0 0.0
      %261 = vmatprep.subr.mxu0 0.0
      %262 = vmatpush1.msra.mxu0 0.0
      %263 = vmatprep.subr.mxu0 0.0
      %264 = vmatpush1.msra.mxu0 0.0
      %265 = vmatprep.subr.mxu0 0.0
      %266 = vmatpush1.msra.mxu0 0.0
      %267 = vmatprep.subr.mxu0 0.0
      %268 = vmatpush1.msra.mxu0 0.0
      %269 = vmatprep.subr.mxu0 0.0
      %270 = vmatpush1.msra.mxu0 0.0
      %271 = vmatprep.subr.mxu0 0.0
      %272 = vmatpush1.msra.mxu0 0.0
      %273 = vmatprep.subr.mxu0 0.0
      %274 = vmatpush1.msra.mxu0 0.0
      %275 = vmatprep.subr.mxu0 0.0
      %276 = vmatpush1.msra.mxu0 0.0
      %277 = vmatprep.subr.mxu0 0.0
      %278 = vmatpush1.msra.mxu0 0.0
      %279 = vmatprep.subr.mxu0 0.0
      %280 = vmatpush1.msra.mxu0 0.0
      %281 = vmatprep.subr.mxu0 0.0
      %282 = vmatpush1.msra.mxu0 0.0
      %283 = vmatprep.subr.mxu0 0.0
      %284 = vmatpush1.msra.mxu0 0.0
      %285 = vmatprep.mubr.f32.mxu0 0.0
      %286 = vmatmul.mubr.f32.gmra.mrb[0].mxu0 %v214
      %v287 = vpop.f32.mrb[0].mxu0
      %v288 = vadd.f32 0.0, %v287
      %v289 = vpop.f32.mrb[0].mxu0
      %v290 = vadd.f32 0.0, %v289
      %291 = vdwg.mxu0
      %292 = vst [vmem:[#allocation2] sm:$0xff] %v288
      %293 = vst [vmem:[#allocation2 + $0x8] sm:$0xff] %v290
      %v294 = vld [vmem:[%s197] sm:$0xff]
      %v295 = vld [vmem:[%s197 + $0x8] sm:$0xf]
      %s296 = scalar_lea.vmem %s1, 8
      %v297 = vld [vmem:[%s296] sm:$0xff]
      %v300 = vcombine.high %v294, %v294
      %301 = vrot.lane.b32.xlu0 %v294, 127
      %v302 = vpop.permute.xlu0 %301
      %303 = vrot.lane.b32.xlu0 %v300, 127
      %v304 = vpop.permute.xlu0 %303
      %305 = vrot.lane.b32.xlu0 %v295, 127
      %v306 = vpop.permute.xlu0 %305
      %vm307 = vcmask 1039360
      %v308 = vsel %vm307, %v302, %v304
      %v309 = vsel %vm307, %v304, %v306
      %v311 = vsel %vm212, %v297, 0
      %v313 = vsel %vm216, %v308, 0
      %v315 = vsel %vm216, %v309, 0
      %317 = vmatprep.subr.mxu0 %v315
      %318 = vmatpush1.msra.mxu0 %v313
      %319 = vmatprep.subr.mxu0 0.0
      %320 = vmatpush1.msra.mxu0 0.0
      %321 = vmatprep.subr.mxu0 0.0
      %322 = vmatpush1.msra.mxu0 0.0
      %323 = vmatprep.subr.mxu0 0.0
      %324 = vmatpush1.msra.mxu0 0.0
      %325 = vmatprep.subr.mxu0 0.0
      %326 = vmatpush1.msra.mxu0 0.0
      %327 = vmatprep.subr.mxu0 0.0
      %328 = vmatpush1.msra.mxu0 0.0
      %329 = vmatprep.subr.mxu0 0.0
      %330 = vmatpush1.msra.mxu0 0.0
      %331 = vmatprep.subr.mxu0 0.0
      %332 = vmatpush1.msra.mxu0 0.0
      %333 = vmatprep.subr.mxu0 0.0
      %334 = vmatpush1.msra.mxu0 0.0
      %335 = vmatprep.subr.mxu0 0.0
      %336 = vmatpush1.msra.mxu0 0.0
      %337 = vmatprep.subr.mxu0 0.0
      %338 = vmatpush1.msra.mxu0 0.0
      %339 = vmatprep.subr.mxu0 0.0
      %340 = vmatpush1.msra.mxu0 0.0
      %341 = vmatprep.subr.mxu0 0.0
      %342 = vmatpush1.msra.mxu0 0.0
      %343 = vmatprep.subr.mxu0 0.0
      %344 = vmatpush1.msra.mxu0 0.0
      %345 = vmatprep.subr.mxu0 0.0
      %346 = vmatpush1.msra.mxu0 0.0
      %347 = vmatprep.subr.mxu0 0.0
      %348 = vmatpush1.msra.mxu0 0.0
      %349 = vmatprep.subr.mxu0 0.0
      %350 = vmatpush1.msra.mxu0 0.0
      %351 = vmatprep.subr.mxu0 0.0
      %352 = vmatpush1.msra.mxu0 0.0
      %353 = vmatprep.subr.mxu0 0.0
      %354 = vmatpush1.msra.mxu0 0.0
      %355 = vmatprep.subr.mxu0 0.0
      %356 = vmatpush1.msra.mxu0 0.0
      %357 = vmatprep.subr.mxu0 0.0
      %358 = vmatpush1.msra.mxu0 0.0
      %359 = vmatprep.subr.mxu0 0.0
      %360 = vmatpush1.msra.mxu0 0.0
      %361 = vmatprep.subr.mxu0 0.0
      %362 = vmatpush1.msra.mxu0 0.0
      %363 = vmatprep.subr.mxu0 0.0
      %364 = vmatpush1.msra.mxu0 0.0
      %365 = vmatprep.subr.mxu0 0.0
      %366 = vmatpush1.msra.mxu0 0.0
      %367 = vmatprep.subr.mxu0 0.0
      %368 = vmatpush1.msra.mxu0 0.0
      %369 = vmatprep.subr.mxu0 0.0
      %370 = vmatpush1.msra.mxu0 0.0
      %371 = vmatprep.subr.mxu0 0.0
      %372 = vmatpush1.msra.mxu0 0.0
      %373 = vmatprep.subr.mxu0 0.0
      %374 = vmatpush1.msra.mxu0 0.0
      %375 = vmatprep.subr.mxu0 0.0
      %376 = vmatpush1.msra.mxu0 0.0
      %377 = vmatprep.subr.mxu0 0.0
      %378 = vmatpush1.msra.mxu0 0.0
      %379 = vmatprep.subr.mxu0 0.0
      %380 = vmatpush1.msra.mxu0 0.0
      %381 = vmatprep.mubr.f32.mxu0 0.0
      %382 = vmatmul.mubr.f32.gmra.mrb[0].mxu0 %v311
      %v383 = vpop.f32.mrb[0].mxu0
      %v384 = vadd.f32 0.0, %v383
      %v385 = vpop.f32.mrb[0].mxu0
      %v386 = vadd.f32 0.0, %v385
      %387 = vdwg.mxu0
      %v388 = vld [vmem:[#allocation2] sm:$0xff]
      %v389 = vld [vmem:[#allocation2 + $0x8] sm:$0xff]
      %v390 = vadd.f32 %v388, %v384
      %v391 = vadd.f32 %v389, %v386
      %392 = vst [vmem:[#allocation2] sm:$0xff] %v390
      %393 = vst [vmem:[#allocation2 + $0x8] sm:$0xff] %v391
      %v394 = vld [vmem:[%s197] sm:$0xff]
      %v395 = vld [vmem:[%s197 + $0x8] sm:$0xf]
      %s396 = scalar_lea.vmem %s1, 16
      %v397 = vld [vmem:[%s396] sm:$0xff]
      %v400 = vcombine.high %v394, %v394
      %401 = vrot.lane.b32.xlu0 %v394, 126
      %v402 = vpop.permute.xlu0 %401
      %403 = vrot.lane.b32.xlu0 %v400, 126
      %v404 = vpop.permute.xlu0 %403
      %405 = vrot.lane.b32.xlu0 %v395, 126
      %v406 = vpop.permute.xlu0 %405
      %vm407 = vcmask 1031168
      %v408 = vsel %vm407, %v402, %v404
      %v409 = vsel %vm407, %v404, %v406
      %v411 = vsel %vm212, %v397, 0
      %v413 = vsel %vm216, %v408, 0
      %v415 = vsel %vm216, %v409, 0
      %417 = vmatprep.subr.mxu0 %v415
      %418 = vmatpush1.msra.mxu0 %v413
      %419 = vmatprep.subr.mxu0 0.0
      %420 = vmatpush1.msra.mxu0 0.0
      %421 = vmatprep.subr.mxu0 0.0
      %422 = vmatpush1.msra.mxu0 0.0
      %423 = vmatprep.subr.mxu0 0.0
      %424 = vmatpush1.msra.mxu0 0.0
      %425 = vmatprep.subr.mxu0 0.0
      %426 = vmatpush1.msra.mxu0 0.0
      %427 = vmatprep.subr.mxu0 0.0
      %428 = vmatpush1.msra.mxu0 0.0
      %429 = vmatprep.subr.mxu0 0.0
      %430 = vmatpush1.msra.mxu0 0.0
      %431 = vmatprep.subr.mxu0 0.0
      %432 = vmatpush1.msra.mxu0 0.0
      %433 = vmatprep.subr.mxu0 0.0
      %434 = vmatpush1.msra.mxu0 0.0
      %435 = vmatprep.subr.mxu0 0.0
      %436 = vmatpush1.msra.mxu0 0.0
      %437 = vmatprep.subr.mxu0 0.0
      %438 = vmatpush1.msra.mxu0 0.0
      %439 = vmatprep.subr.mxu0 0.0
      %440 = vmatpush1.msra.mxu0 0.0
      %441 = vmatprep.subr.mxu0 0.0
      %442 = vmatpush1.msra.mxu0 0.0
      %443 = vmatprep.subr.mxu0 0.0
      %444 = vmatpush1.msra.mxu0 0.0
      %445 = vmatprep.subr.mxu0 0.0
      %446 = vmatpush1.msra.mxu0 0.0
      %447 = vmatprep.subr.mxu0 0.0
      %448 = vmatpush1.msra.mxu0 0.0
      %449 = vmatprep.subr.mxu0 0.0
      %450 = vmatpush1.msra.mxu0 0.0
      %451 = vmatprep.subr.mxu0 0.0
      %452 = vmatpush1.msra.mxu0 0.0
      %453 = vmatprep.subr.mxu0 0.0
      %454 = vmatpush1.msra.mxu0 0.0
      %455 = vmatprep.subr.mxu0 0.0
      %456 = vmatpush1.msra.mxu0 0.0
      %457 = vmatprep.subr.mxu0 0.0
      %458 = vmatpush1.msra.mxu0 0.0
      %459 = vmatprep.subr.mxu0 0.0
      %460 = vmatpush1.msra.mxu0 0.0
      %461 = vmatprep.subr.mxu0 0.0
      %462 = vmatpush1.msra.mxu0 0.0
      %463 = vmatprep.subr.mxu0 0.0
      %464 = vmatpush1.msra.mxu0 0.0
      %465 = vmatprep.subr.mxu0 0.0
      %466 = vmatpush1.msra.mxu0 0.0
      %467 = vmatprep.subr.mxu0 0.0
      %468 = vmatpush1.msra.mxu0 0.0
      %469 = vmatprep.subr.mxu0 0.0
      %470 = vmatpush1.msra.mxu0 0.0
      %471 = vmatprep.subr.mxu0 0.0
      %472 = vmatpush1.msra.mxu0 0.0
      %473 = vmatprep.subr.mxu0 0.0
      %474 = vmatpush1.msra.mxu0 0.0
      %475 = vmatprep.subr.mxu0 0.0
      %476 = vmatpush1.msra.mxu0 0.0
      %477 = vmatprep.subr.mxu0 0.0
      %478 = vmatpush1.msra.mxu0 0.0
      %479 = vmatprep.subr.mxu0 0.0
      %480 = vmatpush1.msra.mxu0 0.0
      %481 = vmatprep.mubr.f32.mxu0 0.0
      %482 = vmatmul.mubr.f32.gmra.mrb[0].mxu0 %v411
      %v483 = vpop.f32.mrb[0].mxu0
      %v484 = vadd.f32 0.0, %v483
      %v485 = vpop.f32.mrb[0].mxu0
      %v486 = vadd.f32 0.0, %v485
      %487 = vdwg.mxu0
      %v488 = vld [vmem:[#allocation2] sm:$0xff]
      %v489 = vld [vmem:[#allocation2 + $0x8] sm:$0xff]
      %v490 = vadd.f32 %v488, %v484
      %v491 = vadd.f32 %v489, %v486
      %492 = vst [vmem:[#allocation2] sm:$0xff] %v490
      %493 = vst [vmem:[#allocation2 + $0x8] sm:$0xff] %v491
      %v494 = vld [vmem:[%s197] sm:$0xff]
      %v495 = vld [vmem:[%s197 + $0x8] sm:$0xf]
      %s496 = scalar_lea.vmem %s1, 24
      %v497 = vld [vmem:[%s496] sm:$0xff]
      %v500 = vcombine.high %v494, %v494
      %501 = vrot.lane.b32.xlu0 %v494, 112
      %v502 = vpop.permute.xlu0 %501
      %503 = vrot.lane.b32.xlu0 %v500, 112
      %v504 = vpop.permute.xlu0 %503
      %505 = vrot.lane.b32.xlu0 %v495, 112
      %v506 = vpop.permute.xlu0 %505
      %vm507 = vcmask 916480
      %v508 = vsel %vm507, %v502, %v504
      %v509 = vsel %vm507, %v504, %v506
      %v511 = vsel %vm212, %v497, 0
      %v513 = vsel %vm216, %v508, 0
      %v515 = vsel %vm216, %v509, 0
      %517 = vmatprep.subr.mxu0 %v515
      %518 = vmatpush1.msra.mxu0 %v513
      %519 = vmatprep.subr.mxu0 0.0
      %520 = vmatpush1.msra.mxu0 0.0
      %521 = vmatprep.subr.mxu0 0.0
      %522 = vmatpush1.msra.mxu0 0.0
      %523 = vmatprep.subr.mxu0 0.0
      %524 = vmatpush1.msra.mxu0 0.0
      %525 = vmatprep.subr.mxu0 0.0
      %526 = vmatpush1.msra.mxu0 0.0
      %527 = vmatprep.subr.mxu0 0.0
      %528 = vmatpush1.msra.mxu0 0.0
      %529 = vmatprep.subr.mxu0 0.0
      %530 = vmatpush1.msra.mxu0 0.0
      %531 = vmatprep.subr.mxu0 0.0
      %532 = vmatpush1.msra.mxu0 0.0
      %533 = vmatprep.subr.mxu0 0.0
      %534 = vmatpush1.msra.mxu0 0.0
      %535 = vmatprep.subr.mxu0 0.0
      %536 = vmatpush1.msra.mxu0 0.0
      %537 = vmatprep.subr.mxu0 0.0
      %538 = vmatpush1.msra.mxu0 0.0
      %539 = vmatprep.subr.mxu0 0.0
      %540 = vmatpush1.msra.mxu0 0.0
      %541 = vmatprep.subr.mxu0 0.0
      %542 = vmatpush1.msra.mxu0 0.0
      %543 = vmatprep.subr.mxu0 0.0
      %544 = vmatpush1.msra.mxu0 0.0
      %545 = vmatprep.subr.mxu0 0.0
      %546 = vmatpush1.msra.mxu0 0.0
      %547 = vmatprep.subr.mxu0 0.0
      %548 = vmatpush1.msra.mxu0 0.0
      %549 = vmatprep.subr.mxu0 0.0
      %550 = vmatpush1.msra.mxu0 0.0
      %551 = vmatprep.subr.mxu0 0.0
      %552 = vmatpush1.msra.mxu0 0.0
      %553 = vmatprep.subr.mxu0 0.0
      %554 = vmatpush1.msra.mxu0 0.0
      %555 = vmatprep.subr.mxu0 0.0
      %556 = vmatpush1.msra.mxu0 0.0
      %557 = vmatprep.subr.mxu0 0.0
      %558 = vmatpush1.msra.mxu0 0.0
      %559 = vmatprep.subr.mxu0 0.0
      %560 = vmatpush1.msra.mxu0 0.0
      %561 = vmatprep.subr.mxu0 0.0
      %562 = vmatpush1.msra.mxu0 0.0
      %563 = vmatprep.subr.mxu0 0.0
      %564 = vmatpush1.msra.mxu0 0.0
      %565 = vmatprep.subr.mxu0 0.0
      %566 = vmatpush1.msra.mxu0 0.0
      %567 = vmatprep.subr.mxu0 0.0
      %568 = vmatpush1.msra.mxu0 0.0
      %569 = vmatprep.subr.mxu0 0.0
      %570 = vmatpush1.msra.mxu0 0.0
      %571 = vmatprep.subr.mxu0 0.0
      %572 = vmatpush1.msra.mxu0 0.0
      %573 = vmatprep.subr.mxu0 0.0
      %574 = vmatpush1.msra.mxu0 0.0
      %575 = vmatprep.subr.mxu0 0.0
      %576 = vmatpush1.msra.mxu0 0.0
      %577 = vmatprep.subr.mxu0 0.0
      %578 = vmatpush1.msra.mxu0 0.0
      %579 = vmatprep.subr.mxu0 0.0
      %580 = vmatpush1.msra.mxu0 0.0
      %581 = vmatprep.mubr.f32.mxu0 0.0
      %582 = vmatmul.mubr.f32.gmra.mrb[0].mxu0 %v511
      %v583 = vpop.f32.mrb[0].mxu0
      %v584 = vadd.f32 0.0, %v583
      %v585 = vpop.f32.mrb[0].mxu0
      %v586 = vadd.f32 0.0, %v585
      %587 = vdwg.mxu0
      %v588 = vld [vmem:[#allocation2] sm:$0xff]
      %v589 = vld [vmem:[#allocation2 + $0x8] sm:$0xff]
      %v590 = vadd.f32 %v588, %v584
      %v591 = vadd.f32 %v589, %v586
      %592 = vst [vmem:[#allocation2] sm:$0xff] %v590
      %593 = vst [vmem:[#allocation2 + $0x8] sm:$0xff] %v591
      %v594 = vld [vmem:[%s197] sm:$0xff]
      %v595 = vld [vmem:[%s197 + $0x8] sm:$0xf]
      %s596 = scalar_lea.vmem %s1, 32
      %v597 = vld [vmem:[%s596] sm:$0xff]
      %v600 = vcombine.high %v594, %v594
      %601 = vrot.lane.b32.xlu0 %v594, 111
      %v602 = vpop.permute.xlu0 %601
      %603 = vrot.lane.b32.xlu0 %v600, 111
      %v604 = vpop.permute.xlu0 %603
      %605 = vrot.lane.b32.xlu0 %v595, 111
      %v606 = vpop.permute.xlu0 %605
      %vm607 = vcmask 908288
      %v608 = vsel %vm607, %v602, %v604
      %v609 = vsel %vm607, %v604, %v606
      %v611 = vsel %vm212, %v597, 0
      %v613 = vsel %vm216, %v608, 0
      %v615 = vsel %vm216, %v609, 0
      %617 = vmatprep.subr.mxu0 %v615
      %618 = vmatpush1.msra.mxu0 %v613
      %619 = vmatprep.subr.mxu0 0.0
      %620 = vmatpush1.msra.mxu0 0.0
      %621 = vmatprep.subr.mxu0 0.0
      %622 = vmatpush1.msra.mxu0 0.0
      %623 = vmatprep.subr.mxu0 0.0
      %624 = vmatpush1.msra.mxu0 0.0
      %625 = vmatprep.subr.mxu0 0.0
      %626 = vmatpush1.msra.mxu0 0.0
      %627 = vmatprep.subr.mxu0 0.0
      %628 = vmatpush1.msra.mxu0 0.0
      %629 = vmatprep.subr.mxu0 0.0
      %630 = vmatpush1.msra.mxu0 0.0
      %631 = vmatprep.subr.mxu0 0.0
      %632 = vmatpush1.msra.mxu0 0.0
      %633 = vmatprep.subr.mxu0 0.0
      %634 = vmatpush1.msra.mxu0 0.0
      %635 = vmatprep.subr.mxu0 0.0
      %636 = vmatpush1.msra.mxu0 0.0
      %637 = vmatprep.subr.mxu0 0.0
      %638 = vmatpush1.msra.mxu0 0.0
      %639 = vmatprep.subr.mxu0 0.0
      %640 = vmatpush1.msra.mxu0 0.0
      %641 = vmatprep.subr.mxu0 0.0
      %642 = vmatpush1.msra.mxu0 0.0
      %643 = vmatprep.subr.mxu0 0.0
      %644 = vmatpush1.msra.mxu0 0.0
      %645 = vmatprep.subr.mxu0 0.0
      %646 = vmatpush1.msra.mxu0 0.0
      %647 = vmatprep.subr.mxu0 0.0
      %648 = vmatpush1.msra.mxu0 0.0
      %649 = vmatprep.subr.mxu0 0.0
      %650 = vmatpush1.msra.mxu0 0.0
      %651 = vmatprep.subr.mxu0 0.0
      %652 = vmatpush1.msra.mxu0 0.0
      %653 = vmatprep.subr.mxu0 0.0
      %654 = vmatpush1.msra.mxu0 0.0
      %655 = vmatprep.subr.mxu0 0.0
      %656 = vmatpush1.msra.mxu0 0.0
      %657 = vmatprep.subr.mxu0 0.0
      %658 = vmatpush1.msra.mxu0 0.0
      %659 = vmatprep.subr.mxu0 0.0
      %660 = vmatpush1.msra.mxu0 0.0
      %661 = vmatprep.subr.mxu0 0.0
      %662 = vmatpush1.msra.mxu0 0.0
      %663 = vmatprep.subr.mxu0 0.0
      %664 = vmatpush1.msra.mxu0 0.0
      %665 = vmatprep.subr.mxu0 0.0
      %666 = vmatpush1.msra.mxu0 0.0
      %667 = vmatprep.subr.mxu0 0.0
      %668 = vmatpush1.msra.mxu0 0.0
      %669 = vmatprep.subr.mxu0 0.0
      %670 = vmatpush1.msra.mxu0 0.0
      %671 = vmatprep.subr.mxu0 0.0
      %672 = vmatpush1.msra.mxu0 0.0
      %673 = vmatprep.subr.mxu0 0.0
      %674 = vmatpush1.msra.mxu0 0.0
      %675 = vmatprep.subr.mxu0 0.0
      %676 = vmatpush1.msra.mxu0 0.0
      %677 = vmatprep.subr.mxu0 0.0
      %678 = vmatpush1.msra.mxu0 0.0
      %679 = vmatprep.subr.mxu0 0.0
      %680 = vmatpush1.msra.mxu0 0.0
      %681 = vmatprep.mubr.f32.mxu0 0.0
      %682 = vmatmul.mubr.f32.gmra.mrb[0].mxu0 %v611
      %v683 = vpop.f32.mrb[0].mxu0
      %v684 = vadd.f32 0.0, %v683
      %v685 = vpop.f32.mrb[0].mxu0
      %v686 = vadd.f32 0.0, %v685
      %687 = vdwg.mxu0
      %v688 = vld [vmem:[#allocation2] sm:$0xff]
      %v689 = vld [vmem:[#allocation2 + $0x8] sm:$0xff]
      %v690 = vadd.f32 %v688, %v684
      %v691 = vadd.f32 %v689, %v686
      %692 = vst [vmem:[#allocation2] sm:$0xff] %v690
      %693 = vst [vmem:[#allocation2 + $0x8] sm:$0xff] %v691
      %v694 = vld [vmem:[%s197] sm:$0xff]
      %v695 = vld [vmem:[%s197 + $0x8] sm:$0xf]
      %s696 = scalar_lea.vmem %s1, 40
      %v697 = vld [vmem:[%s696] sm:$0xff]
      %v700 = vcombine.high %v694, %v694
      %701 = vrot.lane.b32.xlu0 %v694, 110
      %v702 = vpop.permute.xlu0 %701
      %703 = vrot.lane.b32.xlu0 %v700, 110
      %v704 = vpop.permute.xlu0 %703
      %705 = vrot.lane.b32.xlu0 %v695, 110
      %v706 = vpop.permute.xlu0 %705
      %vm707 = vcmask 900096
      %v708 = vsel %vm707, %v702, %v704
      %v709 = vsel %vm707, %v704, %v706
      %v711 = vsel %vm212, %v697, 0
      %v713 = vsel %vm216, %v708, 0
      %v715 = vsel %vm216, %v709, 0
      %717 = vmatprep.subr.mxu0 %v715
      %718 = vmatpush1.msra.mxu0 %v713
      %719 = vmatprep.subr.mxu0 0.0
      %720 = vmatpush1.msra.mxu0 0.0
      %721 = vmatprep.subr.mxu0 0.0
      %722 = vmatpush1.msra.mxu0 0.0
      %723 = vmatprep.subr.mxu0 0.0
      %724 = vmatpush1.msra.mxu0 0.0
      %725 = vmatprep.subr.mxu0 0.0
      %726 = vmatpush1.msra.mxu0 0.0
      %727 = vmatprep.subr.mxu0 0.0
      %728 = vmatpush1.msra.mxu0 0.0
      %729 = vmatprep.subr.mxu0 0.0
      %730 = vmatpush1.msra.mxu0 0.0
      %731 = vmatprep.subr.mxu0 0.0
      %732 = vmatpush1.msra.mxu0 0.0
      %733 = vmatprep.subr.mxu0 0.0
      %734 = vmatpush1.msra.mxu0 0.0
      %735 = vmatprep.subr.mxu0 0.0
      %736 = vmatpush1.msra.mxu0 0.0
      %737 = vmatprep.subr.mxu0 0.0
      %738 = vmatpush1.msra.mxu0 0.0
      %739 = vmatprep.subr.mxu0 0.0
      %740 = vmatpush1.msra.mxu0 0.0
      %741 = vmatprep.subr.mxu0 0.0
      %742 = vmatpush1.msra.mxu0 0.0
      %743 = vmatprep.subr.mxu0 0.0
      %744 = vmatpush1.msra.mxu0 0.0
      %745 = vmatprep.subr.mxu0 0.0
      %746 = vmatpush1.msra.mxu0 0.0
      %747 = vmatprep.subr.mxu0 0.0
      %748 = vmatpush1.msra.mxu0 0.0
      %749 = vmatprep.subr.mxu0 0.0
      %750 = vmatpush1.msra.mxu0 0.0
      %751 = vmatprep.subr.mxu0 0.0
      %752 = vmatpush1.msra.mxu0 0.0
      %753 = vmatprep.subr.mxu0 0.0
      %754 = vmatpush1.msra.mxu0 0.0
      %755 = vmatprep.subr.mxu0 0.0
      %756 = vmatpush1.msra.mxu0 0.0
      %757 = vmatprep.subr.mxu0 0.0
      %758 = vmatpush1.msra.mxu0 0.0
      %759 = vmatprep.subr.mxu0 0.0
      %760 = vmatpush1.msra.mxu0 0.0
      %761 = vmatprep.subr.mxu0 0.0
      %762 = vmatpush1.msra.mxu0 0.0
      %763 = vmatprep.subr.mxu0 0.0
      %764 = vmatpush1.msra.mxu0 0.0
      %765 = vmatprep.subr.mxu0 0.0
      %766 = vmatpush1.msra.mxu0 0.0
      %767 = vmatprep.subr.mxu0 0.0
      %768 = vmatpush1.msra.mxu0 0.0
      %769 = vmatprep.subr.mxu0 0.0
      %770 = vmatpush1.msra.mxu0 0.0
      %771 = vmatprep.subr.mxu0 0.0
      %772 = vmatpush1.msra.mxu0 0.0
      %773 = vmatprep.subr.mxu0 0.0
      %774 = vmatpush1.msra.mxu0 0.0
      %775 = vmatprep.subr.mxu0 0.0
      %776 = vmatpush1.msra.mxu0 0.0
      %777 = vmatprep.subr.mxu0 0.0
      %778 = vmatpush1.msra.mxu0 0.0
      %779 = vmatprep.subr.mxu0 0.0
      %780 = vmatpush1.msra.mxu0 0.0
      %781 = vmatprep.mubr.f32.mxu0 0.0
      %782 = vmatmul.mubr.f32.gmra.mrb[0].mxu0 %v711
      %v783 = vpop.f32.mrb[0].mxu0
      %v784 = vadd.f32 0.0, %v783
      %v785 = vpop.f32.mrb[0].mxu0
      %v786 = vadd.f32 0.0, %v785
      %787 = vdwg.mxu0
      %v788 = vld [vmem:[#allocation2] sm:$0xff]
      %v789 = vld [vmem:[#allocation2 + $0x8] sm:$0xff]
      %v790 = vadd.f32 %v788, %v784
      %v791 = vadd.f32 %v789, %v786
      %792 = vst [vmem:[#allocation2] sm:$0xff] %v790
      %793 = vst [vmem:[#allocation2 + $0x8] sm:$0xff] %v791
      %v794 = vld [vmem:[%s197] sm:$0xff]
      %v795 = vld [vmem:[%s197 + $0x8] sm:$0xf]
      %s796 = scalar_lea.vmem %s1, 48
      %v797 = vld [vmem:[%s796] sm:$0xff]
      %v800 = vcombine.high %v794, %v794
      %801 = vrot.lane.b32.xlu0 %v794, 96
      %v802 = vpop.permute.xlu0 %801
      %803 = vrot.lane.b32.xlu0 %v800, 96
      %v804 = vpop.permute.xlu0 %803
      %805 = vrot.lane.b32.xlu0 %v795, 96
      %v806 = vpop.permute.xlu0 %805
      %vm807 = vcmask 785408
      %v808 = vsel %vm807, %v802, %v804
      %v809 = vsel %vm807, %v804, %v806
      %v811 = vsel %vm212, %v797, 0
      %v813 = vsel %vm216, %v808, 0
      %v815 = vsel %vm216, %v809, 0
      %817 = vmatprep.subr.mxu0 %v815
      %818 = vmatpush1.msra.mxu0 %v813
      %819 = vmatprep.subr.mxu0 0.0
      %820 = vmatpush1.msra.mxu0 0.0
      %821 = vmatprep.subr.mxu0 0.0
      %822 = vmatpush1.msra.mxu0 0.0
      %823 = vmatprep.subr.mxu0 0.0
      %824 = vmatpush1.msra.mxu0 0.0
      %825 = vmatprep.subr.mxu0 0.0
      %826 = vmatpush1.msra.mxu0 0.0
      %827 = vmatprep.subr.mxu0 0.0
      %828 = vmatpush1.msra.mxu0 0.0
      %829 = vmatprep.subr.mxu0 0.0
      %830 = vmatpush1.msra.mxu0 0.0
      %831 = vmatprep.subr.mxu0 0.0
      %832 = vmatpush1.msra.mxu0 0.0
      %833 = vmatprep.subr.mxu0 0.0
      %834 = vmatpush1.msra.mxu0 0.0
      %835 = vmatprep.subr.mxu0 0.0
      %836 = vmatpush1.msra.mxu0 0.0
      %837 = vmatprep.subr.mxu0 0.0
      %838 = vmatpush1.msra.mxu0 0.0
      %839 = vmatprep.subr.mxu0 0.0
      %840 = vmatpush1.msra.mxu0 0.0
      %841 = vmatprep.subr.mxu0 0.0
      %842 = vmatpush1.msra.mxu0 0.0
      %843 = vmatprep.subr.mxu0 0.0
      %844 = vmatpush1.msra.mxu0 0.0
      %845 = vmatprep.subr.mxu0 0.0
      %846 = vmatpush1.msra.mxu0 0.0
      %847 = vmatprep.subr.mxu0 0.0
      %848 = vmatpush1.msra.mxu0 0.0
      %849 = vmatprep.subr.mxu0 0.0
      %850 = vmatpush1.msra.mxu0 0.0
      %851 = vmatprep.subr.mxu0 0.0
      %852 = vmatpush1.msra.mxu0 0.0
      %853 = vmatprep.subr.mxu0 0.0
      %854 = vmatpush1.msra.mxu0 0.0
      %855 = vmatprep.subr.mxu0 0.0
      %856 = vmatpush1.msra.mxu0 0.0
      %857 = vmatprep.subr.mxu0 0.0
      %858 = vmatpush1.msra.mxu0 0.0
      %859 = vmatprep.subr.mxu0 0.0
      %860 = vmatpush1.msra.mxu0 0.0
      %861 = vmatprep.subr.mxu0 0.0
      %862 = vmatpush1.msra.mxu0 0.0
      %863 = vmatprep.subr.mxu0 0.0
      %864 = vmatpush1.msra.mxu0 0.0
      %865 = vmatprep.subr.mxu0 0.0
      %866 = vmatpush1.msra.mxu0 0.0
      %867 = vmatprep.subr.mxu0 0.0
      %868 = vmatpush1.msra.mxu0 0.0
      %869 = vmatprep.subr.mxu0 0.0
      %870 = vmatpush1.msra.mxu0 0.0
      %871 = vmatprep.subr.mxu0 0.0
      %872 = vmatpush1.msra.mxu0 0.0
      %873 = vmatprep.subr.mxu0 0.0
      %874 = vmatpush1.msra.mxu0 0.0
      %875 = vmatprep.subr.mxu0 0.0
      %876 = vmatpush1.msra.mxu0 0.0
      %877 = vmatprep.subr.mxu0 0.0
      %878 = vmatpush1.msra.mxu0 0.0
      %879 = vmatprep.subr.mxu0 0.0
      %880 = vmatpush1.msra.mxu0 0.0
      %881 = vmatprep.mubr.f32.mxu0 0.0
      %882 = vmatmul.mubr.f32.gmra.mrb[0].mxu0 %v811
      %v883 = vpop.f32.mrb[0].mxu0
      %v884 = vadd.f32 0.0, %v883
      %v885 = vpop.f32.mrb[0].mxu0
      %v886 = vadd.f32 0.0, %v885
      %887 = vdwg.mxu0
      %v888 = vld [vmem:[#allocation2] sm:$0xff]
      %v889 = vld [vmem:[#allocation2 + $0x8] sm:$0xff]
      %v890 = vadd.f32 %v888, %v884
      %v891 = vadd.f32 %v889, %v886
      %892 = vst [vmem:[#allocation2] sm:$0xff] %v890
      %893 = vst [vmem:[#allocation2 + $0x8] sm:$0xff] %v891
      %v894 = vld [vmem:[%s197] sm:$0xff]
      %v895 = vld [vmem:[%s197 + $0x8] sm:$0xf]
      %s896 = scalar_lea.vmem %s1, 56
      %v897 = vld [vmem:[%s896] sm:$0xff]
      %v900 = vcombine.high %v894, %v894
      %901 = vrot.lane.b32.xlu0 %v894, 95
      %v902 = vpop.permute.xlu0 %901
      %903 = vrot.lane.b32.xlu0 %v900, 95
      %v904 = vpop.permute.xlu0 %903
      %905 = vrot.lane.b32.xlu0 %v895, 95
      %v906 = vpop.permute.xlu0 %905
      %vm907 = vcmask 777216
      %v908 = vsel %vm907, %v902, %v904
      %v909 = vsel %vm907, %v904, %v906
      %v911 = vsel %vm212, %v897, 0
      %v913 = vsel %vm216, %v908, 0
      %v915 = vsel %vm216, %v909, 0
      %917 = vmatprep.subr.mxu0 %v915
      %918 = vmatpush1.msra.mxu0 %v913
      %919 = vmatprep.subr.mxu0 0.0
      %920 = vmatpush1.msra.mxu0 0.0
      %921 = vmatprep.subr.mxu0 0.0
      %922 = vmatpush1.msra.mxu0 0.0
      %923 = vmatprep.subr.mxu0 0.0
      %924 = vmatpush1.msra.mxu0 0.0
      %925 = vmatprep.subr.mxu0 0.0
      %926 = vmatpush1.msra.mxu0 0.0
      %927 = vmatprep.subr.mxu0 0.0
      %928 = vmatpush1.msra.mxu0 0.0
      %929 = vmatprep.subr.mxu0 0.0
      %930 = vmatpush1.msra.mxu0 0.0
      %931 = vmatprep.subr.mxu0 0.0
      %932 = vmatpush1.msra.mxu0 0.0
      %933 = vmatprep.subr.mxu0 0.0
      %934 = vmatpush1.msra.mxu0 0.0
      %935 = vmatprep.subr.mxu0 0.0
      %936 = vmatpush1.msra.mxu0 0.0
      %937 = vmatprep.subr.mxu0 0.0
      %938 = vmatpush1.msra.mxu0 0.0
      %939 = vmatprep.subr.mxu0 0.0
      %940 = vmatpush1.msra.mxu0 0.0
      %941 = vmatprep.subr.mxu0 0.0
      %942 = vmatpush1.msra.mxu0 0.0
      %943 = vmatprep.subr.mxu0 0.0
      %944 = vmatpush1.msra.mxu0 0.0
      %945 = vmatprep.subr.mxu0 0.0
      %946 = vmatpush1.msra.mxu0 0.0
      %947 = vmatprep.subr.mxu0 0.0
      %948 = vmatpush1.msra.mxu0 0.0
      %949 = vmatprep.subr.mxu0 0.0
      %950 = vmatpush1.msra.mxu0 0.0
      %951 = vmatprep.subr.mxu0 0.0
      %952 = vmatpush1.msra.mxu0 0.0
      %953 = vmatprep.subr.mxu0 0.0
      %954 = vmatpush1.msra.mxu0 0.0
      %955 = vmatprep.subr.mxu0 0.0
      %956 = vmatpush1.msra.mxu0 0.0
      %957 = vmatprep.subr.mxu0 0.0
      %958 = vmatpush1.msra.mxu0 0.0
      %959 = vmatprep.subr.mxu0 0.0
      %960 = vmatpush1.msra.mxu0 0.0
      %961 = vmatprep.subr.mxu0 0.0
      %962 = vmatpush1.msra.mxu0 0.0
      %963 = vmatprep.subr.mxu0 0.0
      %964 = vmatpush1.msra.mxu0 0.0
      %965 = vmatprep.subr.mxu0 0.0
      %966 = vmatpush1.msra.mxu0 0.0
      %967 = vmatprep.subr.mxu0 0.0
      %968 = vmatpush1.msra.mxu0 0.0
      %969 = vmatprep.subr.mxu0 0.0
      %970 = vmatpush1.msra.mxu0 0.0
      %971 = vmatprep.subr.mxu0 0.0
      %972 = vmatpush1.msra.mxu0 0.0
      %973 = vmatprep.subr.mxu0 0.0
      %974 = vmatpush1.msra.mxu0 0.0
      %975 = vmatprep.subr.mxu0 0.0
      %976 = vmatpush1.msra.mxu0 0.0
      %977 = vmatprep.subr.mxu0 0.0
      %978 = vmatpush1.msra.mxu0 0.0
      %979 = vmatprep.subr.mxu0 0.0
      %980 = vmatpush1.msra.mxu0 0.0
      %981 = vmatprep.mubr.f32.mxu0 0.0
      %982 = vmatmul.mubr.f32.gmra.mrb[0].mxu0 %v911
      %v983 = vpop.f32.mrb[0].mxu0
      %v984 = vadd.f32 0.0, %v983
      %v985 = vpop.f32.mrb[0].mxu0
      %v986 = vadd.f32 0.0, %v985
      %987 = vdwg.mxu0
      %v988 = vld [vmem:[#allocation2] sm:$0xff]
      %v989 = vld [vmem:[#allocation2 + $0x8] sm:$0xff]
      %v990 = vadd.f32 %v988, %v984
      %v991 = vadd.f32 %v989, %v986
      %992 = vst [vmem:[#allocation2] sm:$0xff] %v990
      %993 = vst [vmem:[#allocation2 + $0x8] sm:$0xff] %v991
      %v994 = vld [vmem:[%s197] sm:$0xff]
      %v995 = vld [vmem:[%s197 + $0x8] sm:$0xf]
      %s996 = scalar_lea.vmem %s1, 64
      %v997 = vld [vmem:[%s996] sm:$0xff]
      %v1000 = vcombine.high %v994, %v994
      %1001 = vrot.lane.b32.xlu0 %v994, 94
      %v1002 = vpop.permute.xlu0 %1001
      %1003 = vrot.lane.b32.xlu0 %v1000, 94
      %v1004 = vpop.permute.xlu0 %1003
      %1005 = vrot.lane.b32.xlu0 %v995, 94
      %v1006 = vpop.permute.xlu0 %1005
      %vm1007 = vcmask 769024
      %v1008 = vsel %vm1007, %v1002, %v1004
      %v1009 = vsel %vm1007, %v1004, %v1006
      %v1011 = vsel %vm212, %v997, 0
      %v1013 = vsel %vm216, %v1008, 0
      %v1015 = vsel %vm216, %v1009, 0
      %1017 = vmatprep.subr.mxu0 %v1015
      %1018 = vmatpush1.msra.mxu0 %v1013
      %1019 = vmatprep.subr.mxu0 0.0
      %1020 = vmatpush1.msra.mxu0 0.0
      %1021 = vmatprep.subr.mxu0 0.0
      %1022 = vmatpush1.msra.mxu0 0.0
      %1023 = vmatprep.subr.mxu0 0.0
      %1024 = vmatpush1.msra.mxu0 0.0
      %1025 = vmatprep.subr.mxu0 0.0
      %1026 = vmatpush1.msra.mxu0 0.0
      %1027 = vmatprep.subr.mxu0 0.0
      %1028 = vmatpush1.msra.mxu0 0.0
      %1029 = vmatprep.subr.mxu0 0.0
      %1030 = vmatpush1.msra.mxu0 0.0
      %1031 = vmatprep.subr.mxu0 0.0
      %1032 = vmatpush1.msra.mxu0 0.0
      %1033 = vmatprep.subr.mxu0 0.0
      %1034 = vmatpush1.msra.mxu0 0.0
      %1035 = vmatprep.subr.mxu0 0.0
      %1036 = vmatpush1.msra.mxu0 0.0
      %1037 = vmatprep.subr.mxu0 0.0
      %1038 = vmatpush1.msra.mxu0 0.0
      %1039 = vmatprep.subr.mxu0 0.0
      %1040 = vmatpush1.msra.mxu0 0.0
      %1041 = vmatprep.subr.mxu0 0.0
      %1042 = vmatpush1.msra.mxu0 0.0
      %1043 = vmatprep.subr.mxu0 0.0
      %1044 = vmatpush1.msra.mxu0 0.0
      %1045 = vmatprep.subr.mxu0 0.0
      %1046 = vmatpush1.msra.mxu0 0.0
      %1047 = vmatprep.subr.mxu0 0.0
      %1048 = vmatpush1.msra.mxu0 0.0
      %1049 = vmatprep.subr.mxu0 0.0
      %1050 = vmatpush1.msra.mxu0 0.0
      %1051 = vmatprep.subr.mxu0 0.0
      %1052 = vmatpush1.msra.mxu0 0.0
      %1053 = vmatprep.subr.mxu0 0.0
      %1054 = vmatpush1.msra.mxu0 0.0
      %1055 = vmatprep.subr.mxu0 0.0
      %1056 = vmatpush1.msra.mxu0 0.0
      %1057 = vmatprep.subr.mxu0 0.0
      %1058 = vmatpush1.msra.mxu0 0.0
      %1059 = vmatprep.subr.mxu0 0.0
      %1060 = vmatpush1.msra.mxu0 0.0
      %1061 = vmatprep.subr.mxu0 0.0
      %1062 = vmatpush1.msra.mxu0 0.0
      %1063 = vmatprep.subr.mxu0 0.0
      %1064 = vmatpush1.msra.mxu0 0.0
      %1065 = vmatprep.subr.mxu0 0.0
      %1066 = vmatpush1.msra.mxu0 0.0
      %1067 = vmatprep.subr.mxu0 0.0
      %1068 = vmatpush1.msra.mxu0 0.0
      %1069 = vmatprep.subr.mxu0 0.0
      %1070 = vmatpush1.msra.mxu0 0.0
      %1071 = vmatprep.subr.mxu0 0.0
      %1072 = vmatpush1.msra.mxu0 0.0
      %1073 = vmatprep.subr.mxu0 0.0
      %1074 = vmatpush1.msra.mxu0 0.0
      %1075 = vmatprep.subr.mxu0 0.0
      %1076 = vmatpush1.msra.mxu0 0.0
      %1077 = vmatprep.subr.mxu0 0.0
      %1078 = vmatpush1.msra.mxu0 0.0
      %1079 = vmatprep.subr.mxu0 0.0
      %1080 = vmatpush1.msra.mxu0 0.0
      %1081 = vmatprep.mubr.f32.mxu0 0.0
      %1082 = vmatmul.mubr.f32.gmra.mrb[0].mxu0 %v1011
      %v1083 = vpop.f32.mrb[0].mxu0
      %v1084 = vadd.f32 0.0, %v1083
      %v1085 = vpop.f32.mrb[0].mxu0
      %v1086 = vadd.f32 0.0, %v1085
      %1087 = vdwg.mxu0
      %v1088 = vld [vmem:[#allocation2] sm:$0xff]
      %v1089 = vld [vmem:[#allocation2 + $0x8] sm:$0xff]
      %v1090 = vadd.f32 %v1088, %v1084
      %v1091 = vadd.f32 %v1089, %v1086
      %1092 = vst [vmem:[#allocation2] sm:$0xff] %v1090
      %1093 = vst [vmem:[#allocation2 + $0x8] sm:$0xff] %v1091
      %v1094 = vld [vmem:[#allocation2] sm:$0xff]
      %v1095 = vld [vmem:[#allocation2 + $0x8] sm:$0xff]
      %v1096 = vld [vmem:[%s2] sm:$0xff]
      %1098 = vset.pattern.permute.xlu0 0
      %1099 = vperm.xlu0 %1098, %v1096
      %v1100 = vpop.permute.xlu0 %1099
      %v1102 = vadd.f32 %v1094, %v1100
      %v1103 = vadd.f32 %v1095, %v1100
      %1104 = vst [vmem:[%s206] sm:$0xff] %v1102
      %1105 = vst [vmem:[%s206 + $0x8] sm:$0xff] %v1103
      %s1106 = smul.u32 2, %s19
      %p1107 = scmp.lt.s32.totalorder %s18, 1
      %s1108 = scalar_select %p1107, %s18, 1
      %p1109 = scmp.lt.s32.totalorder %s1106, 1
      %s1110 = scalar_select %p1109, %s1106, 1
      %s1111 = smul.addr %s1108, 2
      %s1112 = sadd.s32 %s1110, %s1111
      %s1113 = smul.addr %s1112, 8
      %s1114 = scalar_lea.vmem %s3, %s1113
      // Predicated region
      $region33: #{basic_conv_forward.1} parent=31 // pred_check
        %p1115 = pneg %p116
      $region34: #{basic_conv_forward.1} parent=31 // pred_check_branch
        %1117 = sbr.rel (%p1115) target = $region36
      $region35: #{basic_conv_forward.1} parent=31 // pred_region
        %s1118 = smul.u32 2, %s19
      $region36: #{basic_conv_forward.1} parent=31 // pred_fallthru
        _
    $region32: #{basic_conv_forward.1} parent=5 // pred_fallthru
      _
    %p1119 = scmp.le.s32.totalorder 2, %s9
    // Predicated region
    $region37: #{basic_conv_forward.1} parent=5 // pred_check
      %p1120 = pneg %p1119
    $region38: #{basic_conv_forward.1} parent=5 // pred_check_branch
      %1122 = sbr.rel (%p1120) target = $region40
    $region39: #{basic_conv_forward.1} parent=5 // pred_region
      %s1123 = ssub.s32 %s9, 2
      // Predicated region
      $region41: #{basic_conv_forward.1} parent=39 // pred_check
        %p1124 = pneg %p122
      $region42: #{basic_conv_forward.1} parent=39 // pred_check_branch
        %1126 = sbr.rel (%p1124) target = $region44
      $region43: #{basic_conv_forward.1} parent=39 // pred_region
        %s1127 = smul.u32 2, %s21
        %p1128 = scmp.lt.s32.totalorder %s20, 1
        %s1129 = scalar_select %p1128, %s20, 1
        %p1130 = scmp.lt.s32.totalorder %s1127, 1
        %s1131 = scalar_select %p1130, %s1127, 1
        %s1132 = smul.addr %s1129, 2
        %s1133 = sadd.s32 %s1131, %s1132
        %s1134 = smul.addr %s1133, 8
        %s1135 = scalar_lea.vmem %s3, %s1134
      $region44: #{basic_conv_forward.1} parent=39 // pred_fallthru
        _
    $region40: #{basic_conv_forward.1} parent=5 // pred_fallthru
      _
  $region6: #{basic_conv_forward.1} parent=0 // loop_footer
    %s13 = sadd.s32 1, %s9
  $region7: #{basic_conv_forward.1} parent=0 // loop_footer_branch
    %8 = sbr.rel target = $region3
  $region8: #{basic_conv_forward.1} parent=0 // loop_exit
    _

</llo_original>
